<compile_context>
chip_gen: v7x
topology: tpu7x:2x2x1
jax: 0.10.0
libtpu: 0.0.40
codegen_flags: <defaults>
</compile_context>

<pallas_src>
import functools

import jax
import jax.numpy as jnp
from jax import lax
from jax.experimental import pallas as pl
from jax.experimental.pallas import tpu as pltpu

EPS = 1e-07

LANES = 128     # lane tile (last dim)
SUBLANES = 8    # f32 sublane tile
R_TILE = 2048   # max rows per grid step -> 2048*128*4B = 1 MiB f32 per input


def _round_up(x, m):
    return ((x + m - 1) // m) * m


def _row_granularity(dtype):
    """Packed sublane tiling: 8 rows f32, 16 rows bf16, 32 rows int8/fp8."""
    itemsize = jnp.dtype(dtype).itemsize
    return SUBLANES * max(1, 4 // max(1, itemsize))


def _bce_loss_kernel(pos_ref, neg_ref, out_ref, acc_pos, acc_neg, *,
                     n_pos, n_neg, r_blk, pos_scale, neg_scale):
    t = pl.program_id(0)
    tile_elems = r_blk * LANES
    base = t * tile_elems                      # global element index of tile start

    @pl.when(t == 0)
    def _init():
        acc_pos[...] = jnp.zeros_like(acc_pos)
        acc_neg[...] = jnp.zeros_like(acc_neg)

    def _tile_sum(v):
        # (r_blk,128)->(r_blk//8,8,128) groups whole (8,128) tiles (layout-free);
        # the leading-axis sum is plain VPU vreg adds (no cross-lane XLU work).
        return jnp.sum(v.reshape(r_blk // SUBLANES, SUBLANES, LANES), axis=0)

    def _accumulate(ref, acc, n, is_neg):
        def _val():
            x = ref[...].astype(jnp.float32)
            return -jnp.log((1.0 - x if is_neg else x) + EPS)

        if n >= tile_elems:
            # Fast path: tile fully in range -> no iota / compare / select.
            @pl.when(base + tile_elems <= n)
            def _full():
                acc[...] += _tile_sum(_val())

        if 0 < n % tile_elems:
            # Single ragged tail tile: mask by the true element count.
            @pl.when(jnp.logical_and(base < n, base + tile_elems > n))
            def _tail():
                row = lax.broadcasted_iota(jnp.int32, (r_blk, LANES), 0)
                lane = lax.broadcasted_iota(jnp.int32, (r_blk, LANES), 1)
                idx = base + row * LANES + lane
                acc[...] += _tile_sum(jnp.where(idx < n, _val(), 0.0))

    _accumulate(pos_ref, acc_pos, n_pos, False)
    _accumulate(neg_ref, acc_neg, n_neg, True)

    @pl.when(t == pl.num_programs(0) - 1)
    def _finalize():
        # pos_weight and 1/N are static -> folded into compile-time constants.
        loss = (jnp.float32(pos_scale) * jnp.sum(acc_pos[...])
                + jnp.float32(neg_scale) * jnp.sum(acc_neg[...]))
        out_ref[...] = jnp.full((SUBLANES, LANES), loss, dtype=jnp.float32)


def _prep(x):
    """Flatten; pad to a lane multiple only when needed (free reshape otherwise)."""
    x = jnp.ravel(jnp.asarray(x))
    n = int(x.shape[0])
    rows = max(pl.cdiv(n, LANES), 1)
    padded = rows * LANES
    if padded != n:
        # Pad values never matter: the kernel masks by the true count n.
        # TODO(synk): pl.ANY + manual DMA would remove this copy for large
        # lane-unaligned inputs.
        x = jnp.pad(x, (0, padded - n))
    return x.reshape(rows, LANES), n, rows


@functools.partial(jax.jit, static_argnames=("pos_weight", "reduction", "r_tile"))
def _bce_loss_pallas(pos_pred, neg_pred, *, pos_weight, reduction, r_tile=None):
    pos2, n_pos, rows_pos = _prep(pos_pred)
    neg2, n_neg, rows_neg = _prep(neg_pred)

    gran = max(_row_granularity(pos2.dtype), _row_granularity(neg2.dtype))
    max_rows = max(rows_pos, rows_neg)
    r_blk = min(_round_up(r_tile or R_TILE, gran), _round_up(max_rows, gran))

    tiles_pos = pl.cdiv(rows_pos, r_blk)
    tiles_neg = pl.cdiv(rows_neg, r_blk)
    num_tiles = max(tiles_pos, tiles_neg)
    last_pos = tiles_pos - 1
    last_neg = tiles_neg - 1

    if reduction == "mean":
        pos_scale = pos_weight * (1.0 / n_pos if n_pos else float("nan"))
        neg_scale = 1.0 / n_neg if n_neg else float("nan")
    else:  # "sum"
        pos_scale = float(pos_weight)
        neg_scale = 1.0

    kernel = functools.partial(
        _bce_loss_kernel, n_pos=n_pos, n_neg=n_neg, r_blk=r_blk,
        pos_scale=float(pos_scale), neg_scale=float(neg_scale))

    out = pl.pallas_call(
        kernel,
        out_shape=jax.ShapeDtypeStruct((SUBLANES, LANES), jnp.float32),
        grid_spec=pltpu.PrefetchScalarGridSpec(
            num_scalar_prefetch=0,
            grid=(num_tiles,),
            in_specs=[
                # Clamp the shorter input's tile index; overshoot steps are
                # skipped in-kernel and the unchanged index avoids a re-DMA.
                pl.BlockSpec((r_blk, LANES),
                             lambda t: (jnp.minimum(t, last_pos), 0)),
                pl.BlockSpec((r_blk, LANES),
                             lambda t: (jnp.minimum(t, last_neg), 0)),
            ],
            out_specs=pl.BlockSpec((SUBLANES, LANES), lambda t: (0, 0)),
            scratch_shapes=[pltpu.VMEM((SUBLANES, LANES), jnp.float32),
                            pltpu.VMEM((SUBLANES, LANES), jnp.float32)]),
        compiler_params=pltpu.CompilerParams(
            dimension_semantics=("arbitrary",)),
        # TODO(synk): v7x 2-TC split via a leading CORE_PARALLEL grid axis.
    )(pos2, neg2)

    return out[0, 0]


class BCELoss:
    """Pallas port of graphgallery BCELoss (scalar pos_weight, 'mean'/'sum')."""

    def __init__(self, pos_weight=1.0, reduction="mean"):
        # TODO(synk): reduction='none' (elementwise output) not implemented.
        assert reduction in ("mean", "sum")
        self.pos_weight = float(pos_weight)
        self.reduction = reduction

    def __call__(self, pos_pred, neg_pred):
        return _bce_loss_pallas(pos_pred, neg_pred,
                                pos_weight=self.pos_weight,
                                reduction=self.reduction)


def _reference(pos_pred, neg_pred, pos_weight=1.0, reduction="mean"):
    red = jnp.mean if reduction == "mean" else jnp.sum
    pos_loss = red(-jnp.log(pos_pred.astype(jnp.float32) + EPS))
    neg_loss = red(-jnp.log(1.0 - neg_pred.astype(jnp.float32) + EPS))
    return pos_weight * pos_loss + neg_loss


if __name__ == "__main__":
    key = jax.random.PRNGKey(0)
    k1, k2, k3, k4 = jax.random.split(key, 4)

    def _check(got, want, what):
        got = jax.block_until_ready(got)
        assert jnp.allclose(got, want, rtol=2e-4, atol=1e-5), (what, got, want)

    # 1) Typical link-prediction workload (unaligned, single tile).
    pos_pred = jax.random.uniform(k1, (300,), jnp.float32, minval=0.05, maxval=0.95)
    neg_pred = jax.random.uniform(k2, (450,), jnp.float32, minval=0.05, maxval=0.95)
    for reduction in ("mean", "sum"):
        for w in (1.0, 2.5):
            loss = BCELoss(pos_weight=w, reduction=reduction)(pos_pred, neg_pred)
            _check(loss, _reference(pos_pred, neg_pred, w, reduction),
                   (reduction, w))

    # 2) Lane-aligned inputs: zero-copy path + full-tile fast path.
    pos_a = jax.random.uniform(k3, (1024,), jnp.float32, minval=0.05, maxval=0.95)
    neg_a = jax.random.uniform(k4, (640,), jnp.float32, minval=0.05, maxval=0.95)
    _check(BCELoss(1.5, "mean")(pos_a, neg_a),
           _reference(pos_a, neg_a, 1.5, "mean"), "aligned-mean")

    # 3) Multi-tile accumulation (small r_tile override): full + tail + overshoot.
    pos_m = jax.random.uniform(k1, (2000,), jnp.float32, minval=0.05, maxval=0.95)
    neg_m = jax.random.uniform(k2, (500,), jnp.float32, minval=0.05, maxval=0.95)
    _check(_bce_loss_pallas(pos_m, neg_m, pos_weight=2.0, reduction="sum", r_tile=8),
           _reference(pos_m, neg_m, 2.0, "sum"), "multi-tile-sum")

    print("KERNEL_OK")
</pallas_src>

<mosaic_0001>
module attributes {stable_mosaic.version = 11 : i64} {
  func.func @_bce_loss_kernel(%arg0: i32, %arg1: memref<8x128xf32, #tpu.memory_space<vmem>>, %arg2: memref<8x128xf32, #tpu.memory_space<vmem>>, %arg3: memref<8x128xf32, #tpu.memory_space<vmem>>, %arg4: memref<8x128xf32, #tpu.memory_space<vmem>>, %arg5: memref<8x128xf32, #tpu.memory_space<vmem>>) attributes {dimension_semantics = [#tpu.dimension_semantics<arbitrary>], iteration_bounds = array<i64: 1>, scalar_prefetch = 0 : i64, scratch_operands = 2 : i64, tpu.core_type = #tpu.core_type<tc>, window_params = [{transform_indices = @transform_0, window_bounds = array<i64: 8, 128>}, {transform_indices = @transform_1, window_bounds = array<i64: 8, 128>}, {pipeline_mode = #tpu.pipeline_mode<synchronous>, transform_indices = @transform_2, window_bounds = array<i64: 8, 128>}]} {
    %c1024_i32 = arith.constant 1024 : i32
    %0 = arith.muli %arg0, %c1024_i32 : i32
    %c0_i32 = arith.constant 0 : i32
    %1 = arith.cmpi eq, %arg0, %c0_i32 : i32
    %2 = arith.extui %1 : i1 to i32
    %c0_i32_0 = arith.constant 0 : i32
    %3 = arith.cmpi ne, %2, %c0_i32_0 : i32
    scf.if %3 {
      %cst = arith.constant 0.000000e+00 : f32
      %19 = vector.broadcast %cst : f32 to vector<8x128xf32>
      %c0 = arith.constant 0 : index
      %c0_9 = arith.constant 0 : index
      %20 = vector.load %arg4[%c0, %c0_9] : memref<8x128xf32, #tpu.memory_space<vmem>>, vector<8x128xf32>
      tpu.vector_store %arg4[%c0, %c0_9], %19 {strides = array<i32>} : memref<8x128xf32, #tpu.memory_space<vmem>>, vector<8x128xf32>,
      %cst_10 = arith.constant 0.000000e+00 : f32
      %21 = vector.broadcast %cst_10 : f32 to vector<8x128xf32>
      %c0_11 = arith.constant 0 : index
      %c0_12 = arith.constant 0 : index
      %22 = vector.load %arg5[%c0_11, %c0_12] : memref<8x128xf32, #tpu.memory_space<vmem>>, vector<8x128xf32>
      tpu.vector_store %arg5[%c0_11, %c0_12], %21 {strides = array<i32>} : memref<8x128xf32, #tpu.memory_space<vmem>>, vector<8x128xf32>,
    } else {
    }
    %c300_i32 = arith.constant 300 : i32
    %4 = arith.cmpi slt, %0, %c300_i32 : i32
    %c1024_i32_1 = arith.constant 1024 : i32
    %5 = arith.addi %0, %c1024_i32_1 : i32
    %c300_i32_2 = arith.constant 300 : i32
    %6 = arith.cmpi sgt, %5, %c300_i32_2 : i32
    %7 = arith.andi %4, %6 : i1
    %8 = arith.extui %7 : i1 to i32
    %c0_i32_3 = arith.constant 0 : i32
    %9 = arith.cmpi ne, %8, %c0_i32_3 : i32
    scf.if %9 {
      %19 = tpu.iota {dimensions = array<i32: 0>} : vector<8x128xi32>
      %20 = tpu.iota {dimensions = array<i32: 1>} : vector<8x128xi32>
      %c128_i32 = arith.constant 128 : i32
      %21 = vector.broadcast %c128_i32 : i32 to vector<8x128xi32>
      %22 = arith.muli %19, %21 : vector<8x128xi32>
      %23 = vector.broadcast %0 : i32 to vector<8x128xi32>
      %24 = arith.addi %23, %22 : vector<8x128xi32>
      %25 = arith.addi %24, %20 : vector<8x128xi32>
      %c0 = arith.constant 0 : index
      %c0_9 = arith.constant 0 : index
      %26 = vector.load %arg4[%c0, %c0_9] : memref<8x128xf32, #tpu.memory_space<vmem>>, vector<8x128xf32>
      %c300_i32_10 = arith.constant 300 : i32
      %27 = vector.broadcast %c300_i32_10 : i32 to vector<8x128xi32>
      %28 = arith.cmpi slt, %25, %27 : vector<8x128xi32>
      %c0_11 = arith.constant 0 : index
      %c0_12 = arith.constant 0 : index
      %29 = vector.load %arg1[%c0_11, %c0_12] : memref<8x128xf32, #tpu.memory_space<vmem>>, vector<8x128xf32>
      %cst = arith.constant 1.000000e-07 : f32
      %30 = vector.broadcast %cst : f32 to vector<8x128xf32>
      %31 = arith.addf %29, %30 : vector<8x128xf32>
      %32 = math.log %31 : vector<8x128xf32>
      %cst_13 = arith.constant 0.000000e+00 : f32
      %33 = vector.broadcast %cst_13 : f32 to vector<8x128xf32>
      %34 = arith.subf %33, %32 : vector<8x128xf32>
      %cst_14 = arith.constant 0.000000e+00 : f32
      %35 = vector.broadcast %cst_14 : f32 to vector<8x128xf32>
      %36 = arith.select %28, %34, %35 : vector<8x128xi1>, vector<8x128xf32>
      %37 = vector.shape_cast %36 : vector<8x128xf32> to vector<1x8x128xf32>
      %cst_15 = arith.constant dense<0.000000e+00> : vector<8x128xf32>
      %38 = vector.multi_reduction <add>, %37, %cst_15 [0] : vector<1x8x128xf32> to vector<8x128xf32>
      %39 = arith.addf %26, %38 : vector<8x128xf32>
      %c0_16 = arith.constant 0 : index
      %c0_17 = arith.constant 0 : index
      %40 = vector.load %arg4[%c0_16, %c0_17] : memref<8x128xf32, #tpu.memory_space<vmem>>, vector<8x128xf32>
      tpu.vector_store %arg4[%c0_16, %c0_17], %39 {strides = array<i32>} : memref<8x128xf32, #tpu.memory_space<vmem>>, vector<8x128xf32>,
    } else {
    }
    %c450_i32 = arith.constant 450 : i32
    %10 = arith.cmpi slt, %0, %c450_i32 : i32
    %c1024_i32_4 = arith.constant 1024 : i32
    %11 = arith.addi %0, %c1024_i32_4 : i32
    %c450_i32_5 = arith.constant 450 : i32
    %12 = arith.cmpi sgt, %11, %c450_i32_5 : i32
    %13 = arith.andi %10, %12 : i1
    %14 = arith.extui %13 : i1 to i32
    %c0_i32_6 = arith.constant 0 : i32
    %15 = arith.cmpi ne, %14, %c0_i32_6 : i32
    scf.if %15 {
      %19 = tpu.iota {dimensions = array<i32: 0>} : vector<8x128xi32>
      %20 = tpu.iota {dimensions = array<i32: 1>} : vector<8x128xi32>
      %c128_i32 = arith.constant 128 : i32
      %21 = vector.broadcast %c128_i32 : i32 to vector<8x128xi32>
      %22 = arith.muli %19, %21 : vector<8x128xi32>
      %23 = vector.broadcast %0 : i32 to vector<8x128xi32>
      %24 = arith.addi %23, %22 : vector<8x128xi32>
      %25 = arith.addi %24, %20 : vector<8x128xi32>
      %c0 = arith.constant 0 : index
      %c0_9 = arith.constant 0 : index
      %26 = vector.load %arg5[%c0, %c0_9] : memref<8x128xf32, #tpu.memory_space<vmem>>, vector<8x128xf32>
      %c450_i32_10 = arith.constant 450 : i32
      %27 = vector.broadcast %c450_i32_10 : i32 to vector<8x128xi32>
      %28 = arith.cmpi slt, %25, %27 : vector<8x128xi32>
      %c0_11 = arith.constant 0 : index
      %c0_12 = arith.constant 0 : index
      %29 = vector.load %arg2[%c0_11, %c0_12] : memref<8x128xf32, #tpu.memory_space<vmem>>, vector<8x128xf32>
      %cst = arith.constant 1.000000e+00 : f32
      %30 = vector.broadcast %cst : f32 to vector<8x128xf32>
      %31 = arith.subf %30, %29 : vector<8x128xf32>
      %cst_13 = arith.constant 1.000000e-07 : f32
      %32 = vector.broadcast %cst_13 : f32 to vector<8x128xf32>
      %33 = arith.addf %31, %32 : vector<8x128xf32>
      %34 = math.log %33 : vector<8x128xf32>
      %cst_14 = arith.constant 0.000000e+00 : f32
      %35 = vector.broadcast %cst_14 : f32 to vector<8x128xf32>
      %36 = arith.subf %35, %34 : vector<8x128xf32>
      %cst_15 = arith.constant 0.000000e+00 : f32
      %37 = vector.broadcast %cst_15 : f32 to vector<8x128xf32>
      %38 = arith.select %28, %36, %37 : vector<8x128xi1>, vector<8x128xf32>
      %39 = vector.shape_cast %38 : vector<8x128xf32> to vector<1x8x128xf32>
      %cst_16 = arith.constant dense<0.000000e+00> : vector<8x128xf32>
      %40 = vector.multi_reduction <add>, %39, %cst_16 [0] : vector<1x8x128xf32> to vector<8x128xf32>
      %41 = arith.addf %26, %40 : vector<8x128xf32>
      %c0_17 = arith.constant 0 : index
      %c0_18 = arith.constant 0 : index
      %42 = vector.load %arg5[%c0_17, %c0_18] : memref<8x128xf32, #tpu.memory_space<vmem>>, vector<8x128xf32>
      tpu.vector_store %arg5[%c0_17, %c0_18], %41 {strides = array<i32>} : memref<8x128xf32, #tpu.memory_space<vmem>>, vector<8x128xf32>,
    } else {
    }
    %c0_i32_7 = arith.constant 0 : i32
    %16 = arith.cmpi eq, %arg0, %c0_i32_7 : i32
    %17 = arith.extui %16 : i1 to i32
    %c0_i32_8 = arith.constant 0 : i32
    %18 = arith.cmpi ne, %17, %c0_i32_8 : i32
    scf.if %18 {
      %c0 = arith.constant 0 : index
      %c0_9 = arith.constant 0 : index
      %19 = vector.load %arg4[%c0, %c0_9] : memref<8x128xf32, #tpu.memory_space<vmem>>, vector<8x128xf32>
      %20 = vector.shape_cast %19 : vector<8x128xf32> to vector<1x8x128xf32>
      %cst = arith.constant dense<0.000000e+00> : vector<1xf32>
      %21 = vector.multi_reduction <add>, %20, %cst [1, 2] : vector<1x8x128xf32> to vector<1xf32>
      %22 = vector.shape_cast %21 : vector<1xf32> to vector<1x1x1xf32>
      %23 = vector.extract %22[0, 0, 0] : f32 from vector<1x1x1xf32>
      %cst_10 = arith.constant 0.00333333341 : f32
      %24 = arith.mulf %cst_10, %23 : f32
      %c0_11 = arith.constant 0 : index
      %c0_12 = arith.constant 0 : index
      %25 = vector.load %arg5[%c0_11, %c0_12] : memref<8x128xf32, #tpu.memory_space<vmem>>, vector<8x128xf32>
      %26 = vector.shape_cast %25 : vector<8x128xf32> to vector<1x8x128xf32>
      %cst_13 = arith.constant dense<0.000000e+00> : vector<1xf32>
      %27 = vector.multi_reduction <add>, %26, %cst_13 [1, 2] : vector<1x8x128xf32> to vector<1xf32>
      %28 = vector.shape_cast %27 : vector<1xf32> to vector<1x1x1xf32>
      %29 = vector.extract %28[0, 0, 0] : f32 from vector<1x1x1xf32>
      %cst_14 = arith.constant 0.00222222228 : f32
      %30 = arith.mulf %cst_14, %29 : f32
      %31 = arith.addf %24, %30 : f32
      %32 = vector.broadcast %31 : f32 to vector<8x128xf32>
      %c0_15 = arith.constant 0 : index
      %c0_16 = arith.constant 0 : index
      %33 = vector.load %arg3[%c0_15, %c0_16] : memref<8x128xf32, #tpu.memory_space<vmem>>, vector<8x128xf32>
      tpu.vector_store %arg3[%c0_15, %c0_16], %32 {strides = array<i32>} : memref<8x128xf32, #tpu.memory_space<vmem>>, vector<8x128xf32>,
    } else {
    }
    return
  }
  func.func @transform_0(%arg0: i32) -> (i32, i32) {
    %c0_i32 = arith.constant 0 : i32
    %0 = arith.minsi %arg0, %c0_i32 : i32
    %c0_i32_0 = arith.constant 0 : i32
    %c0_i32_1 = arith.constant 0 : i32
    return %0, %c0_i32_0 : i32, i32
  }
  func.func @transform_1(%arg0: i32) -> (i32, i32) {
    %c0_i32 = arith.constant 0 : i32
    %0 = arith.minsi %arg0, %c0_i32 : i32
    %c0_i32_0 = arith.constant 0 : i32
    %c0_i32_1 = arith.constant 0 : i32
    return %0, %c0_i32_0 : i32, i32
  }
  func.func @transform_2(%arg0: i32) -> (i32, i32) {
    %c0_i32 = arith.constant 0 : i32
    %c0_i32_0 = arith.constant 0 : i32
    %c0_i32_1 = arith.constant 0 : i32
    return %c0_i32, %c0_i32_0 : i32, i32
  }
}

</mosaic_0001>

<llo_original>
// kernel: _bce_loss_pallas.1
$region0: #{_bce_loss_pallas.1}
  #allocation0 [shape = 'u32[]', space=smem, size = 0x4, offset = 0x4, fixed_abs, tag = 'smem constant byte address 0x4 - core index']
  #allocation1 [shape = 'u32[144,128]{1,0:T(1,128)}', space=vmem, size = 0x12000, scoped, tag = 'internal scratch']
  #allocation2 [shape = 'f32[8,128]{1,0:T(8,128)}', space=vmem, size = 0x1000, scoped, tag = 'scratch operand']
  #allocation3 [shape = 'f32[8,128]{1,0:T(8,128)}', space=vmem, size = 0x1000, scoped, tag = 'scratch operand']
  %s0 = inlined_call_operand.vmem [shape: f32[3,128], index: 0, kind: input, shape index: {}]
  %s1 = inlined_call_operand.vmem [shape: f32[4,128], index: 1, kind: input, shape index: {}]
  %s2 = inlined_call_operand.vmem [shape: f32[8,128], index: 2, kind: output, shape index: {}]
  %s3 = sld [smem:[#allocation0]]
  $region34: #{_bce_loss_pallas.1} parent=0
    _
  %s5 = ssub.s32 1, %s3
  %s6 = scalar_select 0, %s5, %s3
  // Predicated region
  $region2: #{_bce_loss_pallas.1} parent=0 // pred_check
    _
  $region3: #{_bce_loss_pallas.1} parent=0 // pred_check_branch
    %8 = sbr.rel (0) target = $region5
  $region4: #{_bce_loss_pallas.1} parent=0 // pred_region
    _
  $region5: #{_bce_loss_pallas.1} parent=0 // pred_fallthru
    _
  // Predicated region
  $region6: #{_bce_loss_pallas.1} parent=0 // pred_check
    _
  $region7: #{_bce_loss_pallas.1} parent=0 // pred_check_branch
    %10 = sbr.rel (0) target = $region9
  $region8: #{_bce_loss_pallas.1} parent=0 // pred_region
    _
  $region9: #{_bce_loss_pallas.1} parent=0 // pred_fallthru
    _
  %s11 = smul.u32 0, 1024
  %p12 = scmp.eq.s32.totalorder 0, 0
  // Predicated region
  $region10: #{_bce_loss_pallas.1} parent=0 // pred_check
    %p13 = pneg %p12
  $region11: #{_bce_loss_pallas.1} parent=0 // pred_check_branch
    %15 = sbr.rel (%p13) target = $region13
  $region12: #{_bce_loss_pallas.1} parent=0 // pred_region
    %16 = vst [vmem:[#allocation2] sm:$0xff] 0.0
    %17 = vst [vmem:[#allocation3] sm:$0xff] 0.0
  $region13: #{_bce_loss_pallas.1} parent=0 // pred_fallthru
    _
  %p18 = scmp.lt.s32.totalorder %s11, 300
  %s19 = sadd.s32 %s11, 1024
  %p20 = scmp.gt.s32.totalorder %s19, 300
  %p21 = pnand %p18, %p20
  %p22 = pneg %p21
  // Predicated region
  $region14: #{_bce_loss_pallas.1} parent=0 // pred_check
    _
  $region15: #{_bce_loss_pallas.1} parent=0 // pred_check_branch
    %24 = sbr.rel (%p21) target = $region17
  $region16: #{_bce_loss_pallas.1} parent=0 // pred_region
    %v25 = vlaneseq
    %v26 = vshrl.u32 %v25, 7
    %v27 = vlaneseq
    %v28 = vand.u32 %v27, 127
    %v29 = vmul.u32 %v26, 128
    %v30 = vstv %s11
    %v31 = vadd.s32 %v30, %v29
    %v32 = vadd.s32 %v31, %v28
    %v33 = vld [vmem:[#allocation2] sm:$0xff]
    %vm34 = vcmp.lt.s32.totalorder %v32, 300
    %v35 = vld [vmem:[%s0] sm:$0xff]
    %v36 = vadd.f32 %v35, 1e-07
    %v37 = vlog2.pop %v36
    %v38 = vmul.f32 %v37, 0.6931472
    %v39 = vsub.f32 0.0, %v38
    %v40 = vsel %vm34, %v39, 0.0
    %v41 = vadd.f32 %v40, 0.0
    %v42 = vadd.f32 %v33, %v41
    %43 = vst [vmem:[#allocation2] sm:$0xff] %v42
  $region17: #{_bce_loss_pallas.1} parent=0 // pred_fallthru
    _
  %p44 = scmp.lt.s32.totalorder %s11, 450
  %p45 = scmp.gt.s32.totalorder %s19, 450
  %p46 = pnand %p44, %p45
  %p47 = pneg %p46
  // Predicated region
  $region18: #{_bce_loss_pallas.1} parent=0 // pred_check
    _
  $region19: #{_bce_loss_pallas.1} parent=0 // pred_check_branch
    %49 = sbr.rel (%p46) target = $region21
  $region20: #{_bce_loss_pallas.1} parent=0 // pred_region
    %v50 = vlaneseq
    %v51 = vshrl.u32 %v50, 7
    %v52 = vlaneseq
    %v53 = vand.u32 %v52, 127
    %v54 = vmul.u32 %v51, 128
    %v55 = vstv %s11
    %v56 = vadd.s32 %v55, %v54
    %v57 = vadd.s32 %v56, %v53
    %v58 = vld [vmem:[#allocation3] sm:$0xff]
    %vm59 = vcmp.lt.s32.totalorder %v57, 450
    %v60 = vld [vmem:[%s1] sm:$0xff]
    %v61 = vsub.f32 1.0, %v60
    %v62 = vadd.f32 %v61, 1e-07
    %v63 = vlog2.pop %v62
    %v64 = vmul.f32 %v63, 0.6931472
    %v65 = vsub.f32 0.0, %v64
    %v66 = vsel %vm59, %v65, 0.0
    %v67 = vadd.f32 %v66, 0.0
    %v68 = vadd.f32 %v58, %v67
    %69 = vst [vmem:[#allocation3] sm:$0xff] %v68
  $region21: #{_bce_loss_pallas.1} parent=0 // pred_fallthru
    _
  // Predicated region
  $region22: #{_bce_loss_pallas.1} parent=0 // pred_check
    %p70 = pneg %p12
  $region23: #{_bce_loss_pallas.1} parent=0 // pred_check_branch
    %72 = sbr.rel (%p70) target = $region25
  $region24: #{_bce_loss_pallas.1} parent=0 // pred_region
    %v73 = vld [vmem:[#allocation2] sm:$0xff]
    %74 = vadd.xlane.f32.xlu0 %v73
    %v75 = vpop.xlane.xlu0 %74
    %v76 = vrot.slane %v75, 4
    %v77 = vadd.f32 %v75, %v76
    %v78 = vrot.slane %v77, 2
    %v79 = vadd.f32 %v77, %v78
    %v80 = vrot.slane %v79, 1
    %v81 = vadd.f32 %v79, %v80
    %s82 = vtos %v81
    %s83 = smul.f32 %s82, 0.0033333334
    %v84 = vld [vmem:[#allocation3] sm:$0xff]
    %85 = vadd.xlane.f32.xlu0 %v84
    %v86 = vpop.xlane.xlu0 %85
    %v87 = vrot.slane %v86, 4
    %v88 = vadd.f32 %v86, %v87
    %v89 = vrot.slane %v88, 2
    %v90 = vadd.f32 %v88, %v89
    %v91 = vrot.slane %v90, 1
    %v92 = vadd.f32 %v90, %v91
    %s93 = vtos %v92
    %s94 = smul.f32 %s93, 0.0022222223
    %s95 = sadd.f32 %s83, %s94
    %v96 = vstv %s95
    %97 = vst [vmem:[%s2] sm:$0xff] %v96
  $region25: #{_bce_loss_pallas.1} parent=0 // pred_fallthru
    _
  // Predicated region
  $region26: #{_bce_loss_pallas.1} parent=0 // pred_check
    _
  $region27: #{_bce_loss_pallas.1} parent=0 // pred_check_branch
    %99 = sbr.rel (0) target = $region29
  $region28: #{_bce_loss_pallas.1} parent=0 // pred_region
    _
  $region29: #{_bce_loss_pallas.1} parent=0 // pred_fallthru
    _
  // Predicated region
  $region30: #{_bce_loss_pallas.1} parent=0 // pred_check
    _
  $region31: #{_bce_loss_pallas.1} parent=0 // pred_check_branch
    %101 = sbr.rel (0) target = $region33
  $region32: #{_bce_loss_pallas.1} parent=0 // pred_region
    _
  $region33: #{_bce_loss_pallas.1} parent=0 // pred_fallthru
    _

</llo_original>
